<compile_context>
chip_gen: v7x
topology: tpu7x:2x2x1
jax: 0.10.0
libtpu: 0.0.40
codegen_flags: <defaults>
</compile_context>

<pallas_src>
import jax
import jax.numpy as jnp
from jax import lax
from jax.experimental import pallas as pl
from jax.experimental.pallas import tpu as pltpu


def _mf_body(ids_ref, wc_ref, p_hbm, out_ref, rows, sems, compute_proj):
    """Gather B embedding rows from HBM, L2-normalize, apply fused classifier.

    ids_ref : SMEM int32 [B]                  model ids (pre-clamped in wrapper)
    wc_ref  : VMEM [1, dim] (C==1) or [dim, C] (C>1, pre-transposed)
    p_hbm   : ANY/HBM [num_models, dim]       embedding table (stays in HBM)
    out_ref : VMEM f32 [B, C]
    rows    : VMEM scratch [B, dim]           gathered embedding rows
    sems    : DMA semaphores (B,)
    compute_proj : () -> f32 [1, dim]         projected prompt embedding
    """
    B, _ = rows.shape

    def row_copy(b):
        return pltpu.make_async_copy(
            p_hbm.at[pl.ds(ids_ref[b], 1), :],   # dynamic row gather from HBM
            rows.at[pl.ds(b, 1), :],
            sems.at[b])

    # Issue all row-gather DMAs first so they overlap the projection compute.
    for b in range(B):            # B is tiny -> static unroll
        row_copy(b).start()

    proj = compute_proj()                                          # [1, dim] f32

    for b in range(B):
        row_copy(b).wait()

    r = rows[...].astype(jnp.float32)                              # [B, dim]
    # normalize(x, p=2, dim=1): x / max(||x||, 1e-12) == x * rsqrt(max(||x||^2, 1e-24))
    inv = lax.rsqrt(
        jnp.maximum(jnp.sum(r * r, axis=1, keepdims=True), 1e-24))  # [B, 1]
    x = r * inv * proj                                             # [B, dim]

    wc = wc_ref[...].astype(jnp.float32)
    if out_ref.shape[1] == 1:
        # Pure VPU multiply + lane reduce; no MXU round-trip.
        out_ref[...] = jnp.sum(x * wc, axis=1, keepdims=True)      # [B, 1]
    else:
        # [B, dim] x [dim, C] (W_cls pre-transposed) -> lane-dense along C.
        out_ref[...] = lax.dot_general(
            x, wc, (((1,), (0,)), ((), ())),
            preferred_element_type=jnp.float32)                    # [B, C]


def _mf_kernel_proj(ids_ref, pe_ref, wp_ref, wc_ref, p_hbm, out_ref, rows, sems):
    # pe_ref : [text_dim, 1]   (column), wp_ref : [text_dim, dim] (pre-transposed)
    # Projection on the VPU/XLU: broadcast multiply + sublane reduce -> [1, dim].
    def compute_proj():
        return jnp.sum(pe_ref[...].astype(jnp.float32) * wp_ref[...].astype(jnp.float32),
                       axis=0, keepdims=True)
    _mf_body(ids_ref, wc_ref, p_hbm, out_ref, rows, sems, compute_proj)


def _mf_kernel_noproj(ids_ref, pe_ref, wc_ref, p_hbm, out_ref, rows, sems):
    # use_proj=False: text_dim == dim, prompt embedding used directly ([1, dim]).
    _mf_body(ids_ref, wc_ref, p_hbm, out_ref, rows, sems,
             lambda: pe_ref[...].astype(jnp.float32))


def mf_forward(P_weight, W_proj, W_cls, model_id, prompt_embed, *, use_proj=True):
    """JAX wrapper reproducing MFModel.forward.

    P_weight     : [num_models, dim]      embedding table (nn.Embedding.weight), f32 or bf16
    W_proj       : [dim, text_dim]        nn.Linear(text_dim, dim, bias=False).weight
    W_cls        : [num_classes, dim]     nn.Linear(dim, num_classes, bias=False).weight
    model_id     : int [B]
    prompt_embed : [text_dim]
    returns      : f32 logits with singleton dims squeezed (like .squeeze())
    """
    num_models, dim = P_weight.shape
    num_classes = W_cls.shape[0]

    # Clamp ids: TPU does not bounds-check the in-kernel HBM row gather.
    ids = jnp.clip(jnp.asarray(model_id, dtype=jnp.int32).reshape(-1),
                   0, num_models - 1)
    B = int(ids.shape[0])

    # Classifier weight: native [1, dim] for C==1 (VPU path);
    # pre-transposed [dim, C] for the MXU path so the output is lane-dense along C.
    wc = W_cls if num_classes == 1 else jnp.swapaxes(W_cls, 0, 1)

    if use_proj:
        wp = jnp.swapaxes(W_proj, 0, 1)               # [text_dim, dim]
        pe = prompt_embed.reshape(-1, 1)              # [text_dim, 1] column
        kernel = _mf_kernel_proj
        vmem_args = (pe, wp, wc)
    else:
        assert prompt_embed.size == dim, "text_dim must equal dim when use_proj=False"
        pe = prompt_embed.reshape(1, dim)             # [1, dim]
        kernel = _mf_kernel_noproj
        vmem_args = (pe, wc)

    smem = pl.BlockSpec(memory_space=pltpu.MemorySpace.SMEM)
    vmem = pl.BlockSpec(memory_space=pltpu.MemorySpace.VMEM)
    hbm = pl.BlockSpec(memory_space=pl.ANY)           # embedding table stays in HBM

    nbytes = lambda a: int(a.size) * a.dtype.itemsize
    resident = (sum(nbytes(a) for a in vmem_args)
                + B * dim * P_weight.dtype.itemsize   # row-gather scratch
                + B * num_classes * 4)                # output
    vmem_limit = int(min(128 * 2**20, max(8 * 2**20, 2 * resident + 2**20)))

    logits = pl.pallas_call(
        kernel,
        out_shape=jax.ShapeDtypeStruct((B, num_classes), jnp.float32),
        in_specs=[smem] + [vmem] * len(vmem_args) + [hbm],
        out_specs=vmem,
        scratch_shapes=[pltpu.VMEM((B, dim), P_weight.dtype),
                        pltpu.SemaphoreType.DMA((B,))],
        compiler_params=pltpu.CompilerParams(vmem_limit_bytes=vmem_limit),
    )(ids, *vmem_args, P_weight)
    return jnp.squeeze(logits)


def pred_win_rate(P_weight, W_proj, W_cls, model_a, model_b, prompt_embed, *, use_proj=True):
    logits = mf_forward(P_weight, W_proj, W_cls,
                        jnp.array([model_a, model_b], dtype=jnp.int32),
                        prompt_embed, use_proj=use_proj)
    return jax.nn.sigmoid(logits[0] - logits[1])


if __name__ == "__main__":
    # Small deterministic configuration consistent with MFModel.__init__.
    dim = 32
    num_models = 8
    text_dim = 64
    num_classes = 1

    key = jax.random.PRNGKey(0)
    k1, k2, k3, k4, k5 = jax.random.split(key, 5)

    P_weight = jax.random.normal(k1, (num_models, dim), dtype=jnp.float32)
    W_proj = jax.random.normal(k2, (dim, text_dim), dtype=jnp.float32) * 0.1
    W_cls = jax.random.normal(k3, (num_classes, dim), dtype=jnp.float32) * 0.1
    # TODO(synk): OPENAI_CLIENT.embeddings.create() has no Pallas/JAX equivalent;
    # the prompt embedding is synthesized deterministically instead.
    prompt_embed = jax.random.normal(k4, (text_dim,), dtype=jnp.float32)

    model_id = jnp.array([0, 1], dtype=jnp.int32)  # forward([model_a, model_b], prompt)

    # Pure-JAX reference pieces.
    me = jnp.take(P_weight, model_id, axis=0)
    me = me / jnp.maximum(jnp.linalg.norm(me, axis=1, keepdims=True), 1e-12)
    proj_ref = prompt_embed @ W_proj.T

    # --- use_proj=True, num_classes=1 (all-VPU path) ---
    logits = jax.block_until_ready(
        mf_forward(P_weight, W_proj, W_cls, model_id, prompt_embed, use_proj=True))
    ref = jnp.squeeze((me * proj_ref) @ W_cls.T)
    assert logits.shape == ref.shape, (logits.shape, ref.shape)
    assert jnp.allclose(logits, ref, atol=2e-3, rtol=2e-3), (logits, ref)

    # --- use_proj=True, num_classes>1 (MXU classifier path, pre-transposed W_cls) ---
    W_cls3 = jax.random.normal(k5, (3, dim), dtype=jnp.float32) * 0.1
    logits3 = jax.block_until_ready(
        mf_forward(P_weight, W_proj, W_cls3, model_id, prompt_embed, use_proj=True))
    ref3 = (me * proj_ref) @ W_cls3.T
    assert logits3.shape == ref3.shape, (logits3.shape, ref3.shape)
    assert jnp.allclose(logits3, ref3, atol=1e-2, rtol=1e-2), (logits3, ref3)

    # --- use_proj=False path (requires text_dim == dim) ---
    pe_same_dim = jax.random.normal(k4, (dim,), dtype=jnp.float32)
    logits_np = jax.block_until_ready(
        mf_forward(P_weight, W_proj, W_cls, model_id, pe_same_dim, use_proj=False))
    ref_np = jnp.squeeze((me * pe_same_dim) @ W_cls.T)
    assert jnp.allclose(logits_np, ref_np, atol=2e-3, rtol=2e-3), (logits_np, ref_np)

    # --- bf16-weight transfer path (weights stay bf16 over HBM->VMEM) ---
    Pb, Wpb, Wcb = (P_weight.astype(jnp.bfloat16), W_proj.astype(jnp.bfloat16),
                    W_cls.astype(jnp.bfloat16))
    logits_bf = jax.block_until_ready(
        mf_forward(Pb, Wpb, Wcb, model_id, prompt_embed.astype(jnp.bfloat16),
                   use_proj=True))
    me_b = jnp.take(Pb.astype(jnp.float32), model_id, axis=0)
    me_b = me_b / jnp.maximum(jnp.linalg.norm(me_b, axis=1, keepdims=True), 1e-12)
    ref_bf = jnp.squeeze(
        (me_b * (prompt_embed.astype(jnp.bfloat16).astype(jnp.float32)
                 @ Wpb.astype(jnp.float32).T)) @ Wcb.astype(jnp.float32).T)
    assert jnp.allclose(logits_bf, ref_bf, atol=1e-2, rtol=1e-2), (logits_bf, ref_bf)

    # --- pred_win_rate smoke test ---
    wr = jax.block_until_ready(
        pred_win_rate(P_weight, W_proj, W_cls, 0, 1, prompt_embed))
    assert wr.shape == () and bool(jnp.isfinite(wr))

    print("KERNEL_OK")
</pallas_src>

<mosaic_0001>
module attributes {stable_mosaic.version = 11 : i64} {
  func.func @_mf_kernel_proj(%arg0: memref<2xi32, #tpu.memory_space<smem>>, %arg1: memref<64x1xf32, #tpu.memory_space<vmem>>, %arg2: memref<64x32xf32, #tpu.memory_space<vmem>>, %arg3: memref<1x32xf32, #tpu.memory_space<vmem>>, %arg4: memref<8x32xf32, #tpu.memory_space<any>>, %arg5: memref<2x1xf32, #tpu.memory_space<vmem>>, %arg6: memref<2x32xf32, #tpu.memory_space<vmem>>, %arg7: memref<2x!tpu.dma_semaphore, #tpu.memory_space<semaphore_mem>>) attributes {dimension_semantics = [], scalar_prefetch = 0 : i64, scratch_operands = 2 : i64, tpu.core_type = #tpu.core_type<tc>} {
    %c0 = arith.constant 0 : index
    %0 = memref.load %arg0[%c0] : memref<2xi32, #tpu.memory_space<smem>>
    %c0_i32 = arith.constant 0 : i32
    %c0_i32_0 = arith.constant 0 : i32
    %1 = tpu.memref_slice %arg4[%0, %c0_i32_0] : memref<8x32xf32, #tpu.memory_space<any>> -> memref<1x32xf32, #tpu.memory_space<any>>
    %c0_i32_1 = arith.constant 0 : i32
    %c0_i32_2 = arith.constant 0 : i32
    %2 = tpu.memref_slice %arg6[%c0_i32_1, %c0_i32_2] : memref<2x32xf32, #tpu.memory_space<vmem>> -> memref<1x32xf32, #tpu.memory_space<vmem>>
    %3 = tpu.memref_slice %arg7[%c0_i32] : memref<2x!tpu.dma_semaphore, #tpu.memory_space<semaphore_mem>> -> memref<1x!tpu.dma_semaphore, #tpu.memory_space<semaphore_mem>>
    %4 = tpu.memref_squeeze %3 : memref<1x!tpu.dma_semaphore, #tpu.memory_space<semaphore_mem>> -> memref<!tpu.dma_semaphore, #tpu.memory_space<semaphore_mem>>
    tpu.enqueue_dma source(%1 : memref<1x32xf32, #tpu.memory_space<any>>) target(%2 : memref<1x32xf32, #tpu.memory_space<vmem>>) target_semaphore(%4 : memref<!tpu.dma_semaphore, #tpu.memory_space<semaphore_mem>>)
    %c1 = arith.constant 1 : index
    %5 = memref.load %arg0[%c1] : memref<2xi32, #tpu.memory_space<smem>>
    %c1_i32 = arith.constant 1 : i32
    %c0_i32_3 = arith.constant 0 : i32
    %6 = tpu.memref_slice %arg4[%5, %c0_i32_3] : memref<8x32xf32, #tpu.memory_space<any>> -> memref<1x32xf32, #tpu.memory_space<any>>
    %c1_i32_4 = arith.constant 1 : i32
    %c0_i32_5 = arith.constant 0 : i32
    %7 = tpu.memref_slice %arg6[%c1_i32_4, %c0_i32_5] : memref<2x32xf32, #tpu.memory_space<vmem>> -> memref<1x32xf32, #tpu.memory_space<vmem>>
    %8 = tpu.memref_slice %arg7[%c1_i32] : memref<2x!tpu.dma_semaphore, #tpu.memory_space<semaphore_mem>> -> memref<1x!tpu.dma_semaphore, #tpu.memory_space<semaphore_mem>>
    %9 = tpu.memref_squeeze %8 : memref<1x!tpu.dma_semaphore, #tpu.memory_space<semaphore_mem>> -> memref<!tpu.dma_semaphore, #tpu.memory_space<semaphore_mem>>
    tpu.enqueue_dma source(%6 : memref<1x32xf32, #tpu.memory_space<any>>) target(%7 : memref<1x32xf32, #tpu.memory_space<vmem>>) target_semaphore(%9 : memref<!tpu.dma_semaphore, #tpu.memory_space<semaphore_mem>>)
    %c0_6 = arith.constant 0 : index
    %c0_7 = arith.constant 0 : index
    %10 = vector.load %arg1[%c0_6, %c0_7] : memref<64x1xf32, #tpu.memory_space<vmem>>, vector<64x1xf32>
    %c0_8 = arith.constant 0 : index
    %c0_9 = arith.constant 0 : index
    %11 = vector.load %arg2[%c0_8, %c0_9] : memref<64x32xf32, #tpu.memory_space<vmem>>, vector<64x32xf32>
    %12 = vector.broadcast %10 : vector<64x1xf32> to vector<64x32xf32>
    %13 = arith.mulf %12, %11 : vector<64x32xf32>
    %cst = arith.constant dense<0.000000e+00> : vector<32xf32>
    %14 = vector.multi_reduction <add>, %13, %cst [0] : vector<64x32xf32> to vector<32xf32>
    %15 = vector.shape_cast %14 : vector<32xf32> to vector<1x32xf32>
    %c0_10 = arith.constant 0 : index
    %16 = memref.load %arg0[%c0_10] : memref<2xi32, #tpu.memory_space<smem>>
    %c0_i32_11 = arith.constant 0 : i32
    %c0_i32_12 = arith.constant 0 : i32
    %17 = tpu.memref_slice %arg4[%16, %c0_i32_12] : memref<8x32xf32, #tpu.memory_space<any>> -> memref<1x32xf32, #tpu.memory_space<any>>
    %c0_i32_13 = arith.constant 0 : i32
    %c0_i32_14 = arith.constant 0 : i32
    %18 = tpu.memref_slice %arg6[%c0_i32_13, %c0_i32_14] : memref<2x32xf32, #tpu.memory_space<vmem>> -> memref<1x32xf32, #tpu.memory_space<vmem>>
    %19 = tpu.memref_slice %arg7[%c0_i32_11] : memref<2x!tpu.dma_semaphore, #tpu.memory_space<semaphore_mem>> -> memref<1x!tpu.dma_semaphore, #tpu.memory_space<semaphore_mem>>
    %20 = tpu.memref_squeeze %19 : memref<1x!tpu.dma_semaphore, #tpu.memory_space<semaphore_mem>> -> memref<!tpu.dma_semaphore, #tpu.memory_space<semaphore_mem>>
    tpu.wait_dma2 semaphore(%20 : memref<!tpu.dma_semaphore, #tpu.memory_space<semaphore_mem>>) src(%17 : memref<1x32xf32, #tpu.memory_space<any>>) dst(%18 : memref<1x32xf32, #tpu.memory_space<vmem>>)
    %c1_15 = arith.constant 1 : index
    %21 = memref.load %arg0[%c1_15] : memref<2xi32, #tpu.memory_space<smem>>
    %c1_i32_16 = arith.constant 1 : i32
    %c0_i32_17 = arith.constant 0 : i32
    %22 = tpu.memref_slice %arg4[%21, %c0_i32_17] : memref<8x32xf32, #tpu.memory_space<any>> -> memref<1x32xf32, #tpu.memory_space<any>>
    %c1_i32_18 = arith.constant 1 : i32
    %c0_i32_19 = arith.constant 0 : i32
    %23 = tpu.memref_slice %arg6[%c1_i32_18, %c0_i32_19] : memref<2x32xf32, #tpu.memory_space<vmem>> -> memref<1x32xf32, #tpu.memory_space<vmem>>
    %24 = tpu.memref_slice %arg7[%c1_i32_16] : memref<2x!tpu.dma_semaphore, #tpu.memory_space<semaphore_mem>> -> memref<1x!tpu.dma_semaphore, #tpu.memory_space<semaphore_mem>>
    %25 = tpu.memref_squeeze %24 : memref<1x!tpu.dma_semaphore, #tpu.memory_space<semaphore_mem>> -> memref<!tpu.dma_semaphore, #tpu.memory_space<semaphore_mem>>
    tpu.wait_dma2 semaphore(%25 : memref<!tpu.dma_semaphore, #tpu.memory_space<semaphore_mem>>) src(%22 : memref<1x32xf32, #tpu.memory_space<any>>) dst(%23 : memref<1x32xf32, #tpu.memory_space<vmem>>)
    %c0_20 = arith.constant 0 : index
    %c0_21 = arith.constant 0 : index
    %26 = vector.load %arg6[%c0_20, %c0_21] : memref<2x32xf32, #tpu.memory_space<vmem>>, vector<2x32xf32>
    %27 = arith.mulf %26, %26 : vector<2x32xf32>
    %cst_22 = arith.constant dense<0.000000e+00> : vector<2xf32>
    %28 = vector.multi_reduction <add>, %27, %cst_22 [1] : vector<2x32xf32> to vector<2xf32>
    %29 = vector.shape_cast %28 : vector<2xf32> to vector<2x1xf32>
    %cst_23 = arith.constant 1.000000e-24 : f32
    %30 = vector.broadcast %cst_23 : f32 to vector<2x1xf32>
    %31 = arith.maximumf %29, %30 : vector<2x1xf32>
    %32 = math.rsqrt %31 : vector<2x1xf32>
    %33 = vector.broadcast %32 : vector<2x1xf32> to vector<2x32xf32>
    %34 = arith.mulf %26, %33 : vector<2x32xf32>
    %35 = vector.broadcast %15 : vector<1x32xf32> to vector<2x32xf32>
    %36 = arith.mulf %34, %35 : vector<2x32xf32>
    %c0_24 = arith.constant 0 : index
    %c0_25 = arith.constant 0 : index
    %37 = vector.load %arg3[%c0_24, %c0_25] : memref<1x32xf32, #tpu.memory_space<vmem>>, vector<1x32xf32>
    %38 = vector.broadcast %37 : vector<1x32xf32> to vector<2x32xf32>
    %39 = arith.mulf %36, %38 : vector<2x32xf32>
    %cst_26 = arith.constant dense<0.000000e+00> : vector<2xf32>
    %40 = vector.multi_reduction <add>, %39, %cst_26 [1] : vector<2x32xf32> to vector<2xf32>
    %41 = vector.shape_cast %40 : vector<2xf32> to vector<2x1xf32>
    %c0_27 = arith.constant 0 : index
    %c0_28 = arith.constant 0 : index
    %42 = vector.load %arg5[%c0_27, %c0_28] : memref<2x1xf32, #tpu.memory_space<vmem>>, vector<2x1xf32>
    tpu.vector_store %arg5[%c0_27, %c0_28], %41 {strides = array<i32>} : memref<2x1xf32, #tpu.memory_space<vmem>>, vector<2x1xf32>,
    return
  }
}

</mosaic_0001>

<llo_original>
// kernel: tpu_custom_call.1
$region0: #{tpu_custom_call.1}
  #allocation0 [shape = 'u32[]', space=smem, size = 0x4, offset = 0x4, fixed_abs, tag = 'smem constant byte address 0x4 - core index']
  #allocation1 [shape = 'u32[144,128]{1,0:T(1,128)}', space=vmem, size = 0x12000, scoped, tag = 'internal scratch']
  #allocation2 [shape = 'f32[2,32]{1,0:T(2,128)}', space=vmem, size = 0x400, scoped, tag = 'scratch operand']
  #allocation3 [shape = 's32[2]{0}', space=sflag, size = 0x8, scoped, tag = 'scratch operand']
  #allocation6 [shape = 's32[]', space=sflag, size = 0x4, offset = 0, fixed_abs, tag = 'sflag constant byte address 0x0 - dummy sync flag']
  #allocation7 [shape = 's32[]', space=sflag, size = 0x4, offset = 0, fixed_abs, tag = 'sflag constant byte address 0x0 - dummy sync flag']
  %s0 = inlined_call_operand.vmem [shape: s32[2], index: 0, kind: input, shape index: {}]
  %s1 = inlined_call_operand.vmem [shape: f32[64,1], index: 1, kind: input, shape index: {}]
  %s2 = inlined_call_operand.vmem [shape: f32[64,32], index: 2, kind: input, shape index: {}]
  %s3 = inlined_call_operand.vmem [shape: f32[1,32], index: 3, kind: input, shape index: {}]
  %s4 = inlined_call_operand.vmem [shape: f32[8,32], index: 4, kind: input, shape index: {}]
  %s5 = inlined_call_operand.vmem [shape: f32[2,1], index: 5, kind: output, shape index: {}]
  %s6 = sld [smem:[#allocation0]]
  $region90: #{tpu_custom_call.1} parent=0
    _
  %s8 = ssub.s32 1, %s6
  %s9 = scalar_select 0, %s8, %s6
  $region1: #{tpu_custom_call.1} parent=0
    #allocation4 [shape = 'u8[512]{0}', space=smem, size = 0x200, scoped, tag = 'input window, operand 0, single buffered']
    #allocation5 [shape = 's32[1]{0}', space=sflag, size = 0x4, scoped, tag = 'scoped memory for tpu_custom_call.1']
    %10 = vsyncpa [#allocation5], 0
    // Predicated region
    $region2: #{tpu_custom_call.1} parent=1 // pred_check
      _
    $region3: #{tpu_custom_call.1} parent=1 // pred_check_branch
      %12 = sbr.rel (0) target = $region5
    $region4: #{tpu_custom_call.1} parent=1 // pred_region
      %s14 = ssub.s32 16, 16
      %15 = vsyncadd [#allocation5], %s14
      %s17 = sshll.u32 %s0, 4
      %s18 = int_to_ptr.vmem [resolvable:$true] %s17
      %20 = dma.vmem_to_smem %s18, 16, [#allocation4], [#allocation5]
    $region5: #{tpu_custom_call.1} parent=1 // pred_fallthru
      _
    // Predicated region
    $region6: #{tpu_custom_call.1} parent=1 // pred_check
      _
    $region7: #{tpu_custom_call.1} parent=1 // pred_check_branch
      %22 = sbr.rel (0) target = $region9
    $region8: #{tpu_custom_call.1} parent=1 // pred_region
      _
    $region9: #{tpu_custom_call.1} parent=1 // pred_fallthru
      _
    // Predicated region
    $region10: #{tpu_custom_call.1} parent=1 // pred_check
      _
    $region11: #{tpu_custom_call.1} parent=1 // pred_check_branch
      %24 = sbr.rel (0) target = $region13
    $region12: #{tpu_custom_call.1} parent=1 // pred_region
      _
    $region13: #{tpu_custom_call.1} parent=1 // pred_fallthru
      _
    // Predicated region
    $region14: #{tpu_custom_call.1} parent=1 // pred_check
      _
    $region15: #{tpu_custom_call.1} parent=1 // pred_check_branch
      %26 = sbr.rel (0) target = $region17
    $region16: #{tpu_custom_call.1} parent=1 // pred_region
      _
    $region17: #{tpu_custom_call.1} parent=1 // pred_fallthru
      _
    // Predicated region
    $region18: #{tpu_custom_call.1} parent=1 // pred_check
      _
    $region19: #{tpu_custom_call.1} parent=1 // pred_check_branch
      %28 = sbr.rel (0) target = $region21
    $region20: #{tpu_custom_call.1} parent=1 // pred_region
      %29 = dma.done [#allocation5], 16
    $region21: #{tpu_custom_call.1} parent=1 // pred_fallthru
      _
    %30 = sfence
    %s31 = sld [smem:[#allocation4]]
    %s32 = scalar_lea.vmem %s4, %s31
    %p34 = scmp.lt.u32.totalorder 1, 8
    %p35 = pneg %p34
    // Predicated region
    $region22: #{tpu_custom_call.1} parent=1 // pred_check
      _
    $region23: #{tpu_custom_call.1} parent=1 // pred_check_branch
      %37 = sbr.rel (%p34) target = $region25
    $region24: #{tpu_custom_call.1} parent=1 // pred_region
      %s52 = sand.u32 1, 7
      %p53 = scmp.eq.s32.totalorder %s52, 0
      %p54 = pneg %p53
      // Predicated region
      $region37: #{tpu_custom_call.1} parent=24 // pred_check
        _
      $region38: #{tpu_custom_call.1} parent=24 // pred_check_branch
        %56 = sbr.rel (%p53) target = $region40
      $region39: #{tpu_custom_call.1} parent=24 // pred_region
        %s57 = sand.u32 1, 7
        %s58 = ssub.s32 1, %s57
        %s59 = scalar_lea.vmem %s32, %s58
        %s60 = ssub.s32 1, %s57
        %s61 = scalar_lea.vmem [#allocation2], %s60
        %s62 = sshllo.u32 0, %s57
        loop: start=0, step=1, limit=1
        $region41: #{tpu_custom_call.1} parent=39 // loop_pre_header
          _
        $region42: #{tpu_custom_call.1} parent=39 // loop_header
          %s64 = sphi 0, %s68
          %p65 = scmp.ge.s32.totalorder %s64, 1
          %s69 = sphi %s59, %s59
          %s70 = sphi %s61, %s61
        $region43: #{tpu_custom_call.1} parent=39 // loop_header_branch
          %67 = sbr.rel (%p65) target = $region47
        $region44: #{tpu_custom_call.1} parent=39 // loop_body
          %v71 = vld [vmem:[%s69] sm:%s62]
          %72 = vst [vmem:[%s70] sm:%s62] %v71
        $region45: #{tpu_custom_call.1} parent=39 // loop_footer
          %s68 = sadd.s32 1, %s64
        $region46: #{tpu_custom_call.1} parent=39 // loop_footer_branch
          %63 = sbr.rel target = $region42
        $region47: #{tpu_custom_call.1} parent=39 // loop_exit
          _
      $region40: #{tpu_custom_call.1} parent=24 // pred_fallthru
        _
    $region25: #{tpu_custom_call.1} parent=1 // pred_fallthru
      _
    // Predicated region
    $region26: #{tpu_custom_call.1} parent=1 // pred_check
      %p38 = pneg %p34
    $region27: #{tpu_custom_call.1} parent=1 // pred_check_branch
      %40 = sbr.rel (%p38) target = $region29
    $region28: #{tpu_custom_call.1} parent=1 // pred_region
      %s41 = sshllo.u32 0, 1
      loop: start=0, step=1, limit=1
      $region30: #{tpu_custom_call.1} parent=28 // loop_pre_header
        _
      $region31: #{tpu_custom_call.1} parent=28 // loop_header
        %s43 = sphi 0, %s47
        %p44 = scmp.ge.s32.totalorder %s43, 1
        %s48 = sphi %s32, %s32
        %s49 = sphi [#allocation2], [#allocation2]
      $region32: #{tpu_custom_call.1} parent=28 // loop_header_branch
        %46 = sbr.rel (%p44) target = $region36
      $region33: #{tpu_custom_call.1} parent=28 // loop_body
        %v50 = vld [vmem:[%s48] sm:%s41]
        %51 = vst [vmem:[%s49] sm:%s41] %v50
      $region34: #{tpu_custom_call.1} parent=28 // loop_footer
        %s47 = sadd.s32 1, %s43
      $region35: #{tpu_custom_call.1} parent=28 // loop_footer_branch
        %42 = sbr.rel target = $region31
      $region36: #{tpu_custom_call.1} parent=28 // loop_exit
        _
    $region29: #{tpu_custom_call.1} parent=1 // pred_fallthru
      _
    // Predicated region
    $region48: #{tpu_custom_call.1} parent=1 // pred_check
      _
    $region49: #{tpu_custom_call.1} parent=1 // pred_check_branch
      %75 = sbr.rel (0) target = $region51
    $region50: #{tpu_custom_call.1} parent=1 // pred_region
      %76 = vsyncadd [#allocation3], 16
    $region51: #{tpu_custom_call.1} parent=1 // pred_fallthru
      _
    %s77 = sld [smem:[#allocation4 + $0x1]]
    %s78 = scalar_lea.vmem %s4, %s77
    %s79 = scalar_lea.vmem [#allocation2], 1
    %s80 = scalar_lea.sflag [#allocation3], 1
    %p82 = scmp.lt.u32.totalorder 1, 8
    %p83 = pneg %p82
    // Predicated region
    $region52: #{tpu_custom_call.1} parent=1 // pred_check
      _
    $region53: #{tpu_custom_call.1} parent=1 // pred_check_branch
      %85 = sbr.rel (%p82) target = $region55
    $region54: #{tpu_custom_call.1} parent=1 // pred_region
      %s100 = sand.u32 1, 7
      %p101 = scmp.eq.s32.totalorder %s100, 0
      %p102 = pneg %p101
      // Predicated region
      $region67: #{tpu_custom_call.1} parent=54 // pred_check
        _
      $region68: #{tpu_custom_call.1} parent=54 // pred_check_branch
        %104 = sbr.rel (%p101) target = $region70
      $region69: #{tpu_custom_call.1} parent=54 // pred_region
        %s105 = sand.u32 1, 7
        %s106 = ssub.s32 1, %s105
        %s107 = scalar_lea.vmem %s78, %s106
        %s108 = ssub.s32 1, %s105
        %s109 = scalar_lea.vmem %s79, %s108 [#allocation2]
        %s110 = sshllo.u32 0, %s105
        loop: start=0, step=1, limit=1
        $region71: #{tpu_custom_call.1} parent=69 // loop_pre_header
          _
        $region72: #{tpu_custom_call.1} parent=69 // loop_header
          %s112 = sphi 0, %s116
          %p113 = scmp.ge.s32.totalorder %s112, 1
          %s117 = sphi %s107, %s107
          %s118 = sphi %s109, %s109
        $region73: #{tpu_custom_call.1} parent=69 // loop_header_branch
          %115 = sbr.rel (%p113) target = $region77
        $region74: #{tpu_custom_call.1} parent=69 // loop_body
          %v119 = vld [vmem:[%s117] sm:%s110]
          %120 = vst [vmem:[%s118] sm:%s110] %v119
        $region75: #{tpu_custom_call.1} parent=69 // loop_footer
          %s116 = sadd.s32 1, %s112
        $region76: #{tpu_custom_call.1} parent=69 // loop_footer_branch
          %111 = sbr.rel target = $region72
        $region77: #{tpu_custom_call.1} parent=69 // loop_exit
          _
      $region70: #{tpu_custom_call.1} parent=54 // pred_fallthru
        _
    $region55: #{tpu_custom_call.1} parent=1 // pred_fallthru
      _
    // Predicated region
    $region56: #{tpu_custom_call.1} parent=1 // pred_check
      %p86 = pneg %p82
    $region57: #{tpu_custom_call.1} parent=1 // pred_check_branch
      %88 = sbr.rel (%p86) target = $region59
    $region58: #{tpu_custom_call.1} parent=1 // pred_region
      %s89 = sshllo.u32 0, 1
      loop: start=0, step=1, limit=1
      $region60: #{tpu_custom_call.1} parent=58 // loop_pre_header
        _
      $region61: #{tpu_custom_call.1} parent=58 // loop_header
        %s91 = sphi 0, %s95
        %p92 = scmp.ge.s32.totalorder %s91, 1
        %s96 = sphi %s78, %s78
        %s97 = sphi %s79, %s79
      $region62: #{tpu_custom_call.1} parent=58 // loop_header_branch
        %94 = sbr.rel (%p92) target = $region66
      $region63: #{tpu_custom_call.1} parent=58 // loop_body
        %v98 = vld [vmem:[%s96] sm:%s89]
        %99 = vst [vmem:[%s97] sm:%s89] %v98
      $region64: #{tpu_custom_call.1} parent=58 // loop_footer
        %s95 = sadd.s32 1, %s91
      $region65: #{tpu_custom_call.1} parent=58 // loop_footer_branch
        %90 = sbr.rel target = $region61
      $region66: #{tpu_custom_call.1} parent=58 // loop_exit
        _
    $region59: #{tpu_custom_call.1} parent=1 // pred_fallthru
      _
    // Predicated region
    $region78: #{tpu_custom_call.1} parent=1 // pred_check
      _
    $region79: #{tpu_custom_call.1} parent=1 // pred_check_branch
      %123 = sbr.rel (0) target = $region81
    $region80: #{tpu_custom_call.1} parent=1 // pred_region
      %124 = vsyncadd %s80, 16
    $region81: #{tpu_custom_call.1} parent=1 // pred_fallthru
      _
    %v125 = vld [vmem:[%s1] sm:$0xff]
    %v126 = vld [vmem:[%s1 + $0x8] sm:$0xff]
    %v127 = vld [vmem:[%s1 + $0x10] sm:$0xff]
    %v128 = vld [vmem:[%s1 + $0x18] sm:$0xff]
    %v129 = vld [vmem:[%s1 + $0x20] sm:$0xff]
    %v130 = vld [vmem:[%s1 + $0x28] sm:$0xff]
    %v131 = vld [vmem:[%s1 + $0x30] sm:$0xff]
    %v132 = vld [vmem:[%s1 + $0x38] sm:$0xff]
    %v133 = vld [vmem:[%s2] sm:$0xff]
    %v134 = vld [vmem:[%s2 + $0x8] sm:$0xff]
    %v135 = vld [vmem:[%s2 + $0x10] sm:$0xff]
    %v136 = vld [vmem:[%s2 + $0x18] sm:$0xff]
    %v137 = vld [vmem:[%s2 + $0x20] sm:$0xff]
    %v138 = vld [vmem:[%s2 + $0x28] sm:$0xff]
    %v139 = vld [vmem:[%s2 + $0x30] sm:$0xff]
    %v140 = vld [vmem:[%s2 + $0x38] sm:$0xff]
    %142 = vset.pattern.permute.xlu0 0
    %143 = vperm.xlu0 %142, %v125
    %v144 = vpop.permute.xlu0 %143
    %147 = vset.pattern.permute.xlu0 0
    %148 = vperm.xlu0 %147, %v126
    %v149 = vpop.permute.xlu0 %148
    %152 = vset.pattern.permute.xlu0 0
    %153 = vperm.xlu0 %152, %v127
    %v154 = vpop.permute.xlu0 %153
    %157 = vset.pattern.permute.xlu0 0
    %158 = vperm.xlu0 %157, %v128
    %v159 = vpop.permute.xlu0 %158
    %162 = vset.pattern.permute.xlu0 0
    %163 = vperm.xlu0 %162, %v129
    %v164 = vpop.permute.xlu0 %163
    %167 = vset.pattern.permute.xlu0 0
    %168 = vperm.xlu0 %167, %v130
    %v169 = vpop.permute.xlu0 %168
    %172 = vset.pattern.permute.xlu0 0
    %173 = vperm.xlu0 %172, %v131
    %v174 = vpop.permute.xlu0 %173
    %177 = vset.pattern.permute.xlu0 0
    %178 = vperm.xlu0 %177, %v132
    %v179 = vpop.permute.xlu0 %178
    %v181 = vmul.f32 %v144, %v133
    %v182 = vmul.f32 %v149, %v134
    %v183 = vmul.f32 %v154, %v135
    %v184 = vmul.f32 %v159, %v136
    %v185 = vmul.f32 %v164, %v137
    %v186 = vmul.f32 %v169, %v138
    %v187 = vmul.f32 %v174, %v139
    %v188 = vmul.f32 %v179, %v140
    %vm189 = vcmask 261120
    %v190 = vsel %vm189, %v181, 0.0
    %v191 = vsel %vm189, %v182, 0.0
    %v192 = vadd.f32 %v190, %v191
    %v193 = vsel %vm189, %v183, 0.0
    %v194 = vadd.f32 %v192, %v193
    %v195 = vsel %vm189, %v184, 0.0
    %v196 = vadd.f32 %v194, %v195
    %v197 = vsel %vm189, %v185, 0.0
    %v198 = vadd.f32 %v196, %v197
    %v199 = vsel %vm189, %v186, 0.0
    %v200 = vadd.f32 %v198, %v199
    %v201 = vsel %vm189, %v187, 0.0
    %v202 = vadd.f32 %v200, %v201
    %v203 = vsel %vm189, %v188, 0.0
    %v204 = vadd.f32 %v202, %v203
    %v205 = vrot.slane %v204, 4
    %v206 = vadd.f32 %v204, %v205
    %v207 = vrot.slane %v206, 2
    %v208 = vadd.f32 %v206, %v207
    %v209 = vrot.slane %v208, 1
    %v210 = vadd.f32 %v208, %v209
    %s211 = sld [smem:[#allocation4]]
    %s212 = smul.u32 1, 1
    %s213 = sshll.u32 %s212, 4
    %214 = dma.done [#allocation3], %s213
    %s215 = sld [smem:[#allocation4 + $0x1]]
    %s216 = sshll.u32 %s212, 4
    %217 = dma.done %s80, %s216
    %v218 = vld [vmem:[#allocation2] sm:$0x3]
    %v219 = vmul.f32 %v218, %v218
    %vm220 = vcmask 254976
    %v221 = vsel %vm220, %v219, 0.0
    %222 = vadd.xlane.f32.xlu0 %v221
    %v223 = vpop.xlane.xlu0 %222
    %v224 = vmax.f32 %v223, 1e-24
    %v225 = vrsqrt.pop %v224
    %v226 = vmul.f32 %v218, %v225
    %v227 = vmul.f32 %v226, %v210
    %v228 = vld [vmem:[%s3] sm:$0x1]
    %v230 = vlaneseq
    %v231 = vshrl.u32 %v230, 7
    %v232 = vsub.s32 0, %v231
    %v233 = vrot.slane %v228, %v232
    %v235 = vmul.f32 %v227, %v233
    %v236 = vsel %vm220, %v235, 0.0
    %237 = vadd.xlane.f32.xlu0 %v236
    %v238 = vpop.xlane.xlu0 %237
    %vm239 = vcmask 1024
    %240 = vst.msk [vmem:[%s5] sm:$0x3] %vm239, %v238
    // Predicated region
    $region82: #{tpu_custom_call.1} parent=1 // pred_check
      _
    $region83: #{tpu_custom_call.1} parent=1 // pred_check_branch
      %242 = sbr.rel (0) target = $region85
    $region84: #{tpu_custom_call.1} parent=1 // pred_region
      _
    $region85: #{tpu_custom_call.1} parent=1 // pred_fallthru
      _
    // Predicated region
    $region86: #{tpu_custom_call.1} parent=1 // pred_check
      _
    $region87: #{tpu_custom_call.1} parent=1 // pred_check_branch
      %244 = sbr.rel (0) target = $region89
    $region88: #{tpu_custom_call.1} parent=1 // pred_region
      _
    $region89: #{tpu_custom_call.1} parent=1 // pred_fallthru
      _
    %245 = vsyncpa [#allocation5], 1
  %246 = vsyncmov [#allocation3]
  %s247 = vpop.sfrf %246
  %p248 = scmp.eq.s32.totalorder %s247, 0
  %p249 = pneg %p248
  %251 = shalt.err (%p249)
  %s252 = scalar_lea.sflag [#allocation3], 1
  %253 = vsyncmov %s252
  %s254 = vpop.sfrf %253
  %p255 = scmp.eq.s32.totalorder %s254, 0
  %p256 = pneg %p255
  %258 = shalt.err (%p256)

</llo_original>
